<compile_context>
chip_gen: v7x
topology: tpu7x:2x2x1
jax: 0.10.0
libtpu: 0.0.40
codegen_flags: <defaults>
</compile_context>

<pallas_src>
import functools

import jax
import jax.numpy as jnp
from jax.experimental import pallas as pl
from jax.experimental.pallas import tpu as pltpu


def critic_kernel(obs_ref, act_ref, w1_ref, b1_ref, w2_ref, b2_ref,
                  w3_ref, b3_ref, out_ref):
    # In-kernel concat (a few lane shifts; obs_dim+act_dim < 128 lanes), then a
    # single bf16 MXU dot against the packed W1.  Inputs stay in native dtype
    # until this cast.
    x = jnp.concatenate([obs_ref[...], act_ref[...]], axis=-1).astype(jnp.bfloat16)

    # Layer 1: bf16 MXU dot, f32 accumulation, f32 bias + ReLU.
    h1 = jnp.dot(x, w1_ref[...], preferred_element_type=jnp.float32) + b1_ref[...]
    h1 = jnp.maximum(h1, 0.0)

    # Layer 2: bf16 MXU dot, f32 accumulation.
    h2 = (jnp.dot(h1.astype(jnp.bfloat16), w2_ref[...],
                  preferred_element_type=jnp.float32)
          + b2_ref[...])
    h2 = jnp.maximum(h2, 0.0)

    # Head: VPU multiply + cross-lane (XLU) reduce; result is batch-on-lanes so
    # the store is one lane-dense (1, 1, tb) slab instead of a 1-lane column.
    # TODO(synk): benchmark a bf16 MXU-dot head vs this reduce on v6e/v7x.
    q = jnp.sum(h2 * w3_ref[...], axis=-1) + b3_ref[0]
    out_ref[...] = q.reshape(1, 1, -1)


def _round_up(x, m):
    return ((x + m - 1) // m) * m


def _vmem_limit_bytes(tb, in_dim, hidden, in_bytes):
    bf16, f32 = 2, 4
    # Resident weights/biases.
    weights = (in_dim + hidden) * hidden * bf16 + (3 * hidden + 8) * f32
    # Double-buffered input tiles + lane-dense output row.
    io = 2 * tb * (in_dim * in_bytes + f32)
    # In-flight f32 activations (h1, h2, temporaries) with headroom.
    acts = 4 * tb * hidden * f32
    est = weights + io + acts
    # Floor 16 MiB, 2x headroom, capped so it also fits v7x's 64 MiB VMEM.
    return min(max(2 * est, 8 << 20) + (8 << 20), 48 << 20)


@functools.partial(jax.jit, static_argnames=("tile_b",))
def critic_forward(obs, act, params, *, tile_b=2048):
    """Pallas Critic forward. obs: (B, obs_dim), act: (B, act_dim) -> (B, 1)."""
    B, obs_dim = obs.shape
    _, act_dim = act.shape
    in_dim = obs_dim + act_dim
    hidden = params["w2"].shape[0]
    in_bytes = max(obs.dtype.itemsize, act.dtype.itemsize)

    if B < 16:
        tb = B                                     # tiny batch: one full-array tile
    else:
        # At least 2 grid steps (keeps both v7x TensorCores busy); otherwise as
        # few, as large, tiles as possible (the kernel is step-overhead-bound).
        tb = min(tile_b, _round_up(pl.cdiv(B, 2), 8))
    num_tiles = pl.cdiv(B, tb)

    resident = lambda shape: pl.BlockSpec(shape, lambda i: (0, 0))

    cost = pl.CostEstimate(
        flops=2 * B * (in_dim * hidden + hidden * hidden + hidden),
        transcendentals=0,
        bytes_accessed=(B * in_dim * in_bytes + B * 4
                        + (in_dim + hidden) * hidden * 2 + (3 * hidden + 1) * 4),
    )

    out = pl.pallas_call(
        critic_kernel,
        out_shape=jax.ShapeDtypeStruct((num_tiles, 1, tb), jnp.float32),
        grid=(num_tiles,),
        in_specs=[
            pl.BlockSpec((tb, obs_dim), lambda i: (i, 0)),      # obs tile (native dtype)
            pl.BlockSpec((tb, act_dim), lambda i: (i, 0)),      # act tile (native dtype)
            resident((in_dim, hidden)),                         # packed W1 (bf16)
            resident((1, hidden)),                              # b1 (f32)
            resident((hidden, hidden)),                         # W2 (bf16)
            resident((1, hidden)),                              # b2 (f32)
            resident((1, hidden)),                              # w3 row (f32)
            pl.BlockSpec(memory_space=pltpu.MemorySpace.SMEM),  # b3 scalar
        ],
        out_specs=pl.BlockSpec((1, 1, tb), lambda i: (i, 0, 0)),
        compiler_params=pltpu.CompilerParams(
            dimension_semantics=("parallel",),
            vmem_limit_bytes=_vmem_limit_bytes(tb, in_dim, hidden, in_bytes),
        ),
        cost_estimate=cost,
    )(obs, act, params["w1"], params["b1"], params["w2"], params["b2"],
      params["w3"], params["b3"])

    # (num_tiles, 1, tb) lane-dense slab -> (B, 1); padded tail rows discarded.
    return out.reshape(-1)[:B].reshape(B, 1)


def init_critic_params(key, obs_dim, act_dim, hidden_size=256):
    """nn.Linear-style init (uniform +-1/sqrt(fan_in)); W stored (in, out).

    W1 is packed as a single (obs_dim+act_dim, H) matrix (the kernel does the
    concat in VMEM).  W1/W2 are kept bf16 (MXU-native); biases/head in f32.
    """
    def linear(k, fan_in, fan_out):
        kw, kb = jax.random.split(k)
        bound = 1.0 / jnp.sqrt(jnp.float32(fan_in))
        w = jax.random.uniform(kw, (fan_in, fan_out), jnp.float32, -bound, bound)
        b = jax.random.uniform(kb, (1, fan_out), jnp.float32, -bound, bound)
        return w, b

    k1, k2, k3 = jax.random.split(key, 3)
    in_dim = obs_dim + act_dim
    w1, b1 = linear(k1, in_dim, hidden_size)
    w2, b2 = linear(k2, hidden_size, hidden_size)
    w3, b3 = linear(k3, hidden_size, 1)
    return {
        "w1": w1.astype(jnp.bfloat16),   # packed (obs_dim+act_dim, H)
        "b1": b1,
        "w2": w2.astype(jnp.bfloat16),
        "b2": b2,
        "w3": w3.T,                      # (1, H) row vector for the VPU head
        "b3": b3.reshape(1),             # (1,) scalar (lives in SMEM)
    }


def critic_reference(obs, act, params):
    """Pure-JAX reference mirroring the kernel math (bf16 dots, f32 accum)."""
    x = jnp.concatenate([obs, act], axis=-1).astype(jnp.bfloat16)
    h1 = jnp.dot(x, params["w1"], preferred_element_type=jnp.float32) + params["b1"]
    h1 = jnp.maximum(h1, 0.0)
    h2 = (jnp.dot(h1.astype(jnp.bfloat16), params["w2"],
                  preferred_element_type=jnp.float32)
          + params["b2"])
    h2 = jnp.maximum(h2, 0.0)
    return (jnp.sum(h2 * params["w3"], axis=-1, keepdims=True)
            + params["b3"][0])


if __name__ == "__main__":
    # Shapes consistent with Critic.forward: obs (B, obs_dim), act (B, act_dim);
    # hidden kept at the module default 256 (lane-aligned).
    OBS_DIM, ACT_DIM, HIDDEN = 16, 8, 256

    key = jax.random.PRNGKey(0)
    k_params, k1, k2, k3, k4 = jax.random.split(key, 5)
    params = init_critic_params(k_params, OBS_DIM, ACT_DIM, HIDDEN)

    # Case 1: tiny batch (single full-array tile, grid=1).
    # Case 2: B=100 -> two tiles with a partial last tile, exercising the
    # multi-tile lane-dense output path and padded-row masking.
    for B, ko, ka in ((2, k1, k2), (100, k3, k4)):
        obs = jax.random.normal(ko, (B, OBS_DIM), dtype=jnp.float32)
        act = jax.random.normal(ka, (B, ACT_DIM), dtype=jnp.float32)

        q = jax.block_until_ready(critic_forward(obs, act, params))
        q_ref = critic_reference(obs, act, params)

        assert q.shape == (B, 1), q.shape
        assert jnp.allclose(q, q_ref, atol=1e-2, rtol=1e-2), (B, q, q_ref)

    print("KERNEL_OK")
</pallas_src>

<mosaic_0001>
module attributes {stable_mosaic.version = 11 : i64} {
  func.func @critic_kernel(%arg0: i32, %arg1: memref<2x16xf32, #tpu.memory_space<vmem>>, %arg2: memref<2x8xf32, #tpu.memory_space<vmem>>, %arg3: memref<24x256xbf16, #tpu.memory_space<vmem>>, %arg4: memref<1x256xf32, #tpu.memory_space<vmem>>, %arg5: memref<256x256xbf16, #tpu.memory_space<vmem>>, %arg6: memref<1x256xf32, #tpu.memory_space<vmem>>, %arg7: memref<1x256xf32, #tpu.memory_space<vmem>>, %arg8: memref<1xf32, #tpu.memory_space<smem>>, %arg9: memref<1x1x2xf32, #tpu.memory_space<vmem>>) attributes {dimension_semantics = [#tpu.dimension_semantics<parallel>], iteration_bounds = array<i64: 1>, scalar_prefetch = 0 : i64, scratch_operands = 0 : i64, tpu.core_type = #tpu.core_type<tc>, window_params = [{transform_indices = @transform_0, window_bounds = array<i64: 2, 16>}, {transform_indices = @transform_1, window_bounds = array<i64: 2, 8>}, {pipeline_mode = #tpu.pipeline_mode<synchronous>, transform_indices = @transform_2, window_bounds = array<i64: 24, 256>}, {pipeline_mode = #tpu.pipeline_mode<synchronous>, transform_indices = @transform_3, window_bounds = array<i64: 1, 256>}, {pipeline_mode = #tpu.pipeline_mode<synchronous>, transform_indices = @transform_4, window_bounds = array<i64: 256, 256>}, {pipeline_mode = #tpu.pipeline_mode<synchronous>, transform_indices = @transform_5, window_bounds = array<i64: 1, 256>}, {pipeline_mode = #tpu.pipeline_mode<synchronous>, transform_indices = @transform_6, window_bounds = array<i64: 1, 256>}, {transform_indices = @transform_7, window_bounds = array<i64: 1>}, {transform_indices = @transform_8, window_bounds = array<i64: 1, 1, 2>}]} {
    %c0 = arith.constant 0 : index
    %c0_0 = arith.constant 0 : index
    %0 = vector.load %arg1[%c0, %c0_0] : memref<2x16xf32, #tpu.memory_space<vmem>>, vector<2x16xf32>
    %c0_1 = arith.constant 0 : index
    %c0_2 = arith.constant 0 : index
    %1 = vector.load %arg2[%c0_1, %c0_2] : memref<2x8xf32, #tpu.memory_space<vmem>>, vector<2x8xf32>
    %2 = tpu.concatenate %0, %1 in 1 : vector<2x16xf32>, vector<2x8xf32> -> vector<2x24xf32>
    %3 = arith.truncf %2 : vector<2x24xf32> to vector<2x24xbf16>
    %c0_3 = arith.constant 0 : index
    %c0_4 = arith.constant 0 : index
    %4 = vector.load %arg3[%c0_3, %c0_4] : memref<24x256xbf16, #tpu.memory_space<vmem>>, vector<24x256xbf16>
    %cst = arith.constant dense<0.000000e+00> : vector<2x256xf32>
    %5 = tpu.matmul %3, %4, %cst {dimension_numbers = #tpu.dot_dimension_numbers<[1], [0], [0], [1], [0, 0, 1, 1], [], []>} : vector<2x24xbf16>, vector<24x256xbf16>, vector<2x256xf32> -> vector<2x256xf32>
    %c0_5 = arith.constant 0 : index
    %c0_6 = arith.constant 0 : index
    %6 = vector.load %arg4[%c0_5, %c0_6] : memref<1x256xf32, #tpu.memory_space<vmem>>, vector<1x256xf32>
    %7 = vector.broadcast %6 : vector<1x256xf32> to vector<2x256xf32>
    %8 = arith.addf %5, %7 : vector<2x256xf32>
    %cst_7 = arith.constant 0.000000e+00 : f32
    %9 = vector.broadcast %cst_7 : f32 to vector<2x256xf32>
    %10 = arith.maximumf %8, %9 : vector<2x256xf32>
    %11 = arith.truncf %10 : vector<2x256xf32> to vector<2x256xbf16>
    %c0_8 = arith.constant 0 : index
    %c0_9 = arith.constant 0 : index
    %12 = vector.load %arg5[%c0_8, %c0_9] : memref<256x256xbf16, #tpu.memory_space<vmem>>, vector<256x256xbf16>
    %cst_10 = arith.constant dense<0.000000e+00> : vector<2x256xf32>
    %13 = tpu.matmul %11, %12, %cst_10 {dimension_numbers = #tpu.dot_dimension_numbers<[1], [0], [0], [1], [0, 0, 1, 1], [], []>} : vector<2x256xbf16>, vector<256x256xbf16>, vector<2x256xf32> -> vector<2x256xf32>
    %c0_11 = arith.constant 0 : index
    %c0_12 = arith.constant 0 : index
    %14 = vector.load %arg6[%c0_11, %c0_12] : memref<1x256xf32, #tpu.memory_space<vmem>>, vector<1x256xf32>
    %15 = vector.broadcast %14 : vector<1x256xf32> to vector<2x256xf32>
    %16 = arith.addf %13, %15 : vector<2x256xf32>
    %cst_13 = arith.constant 0.000000e+00 : f32
    %17 = vector.broadcast %cst_13 : f32 to vector<2x256xf32>
    %18 = arith.maximumf %16, %17 : vector<2x256xf32>
    %c0_14 = arith.constant 0 : index
    %c0_15 = arith.constant 0 : index
    %19 = vector.load %arg7[%c0_14, %c0_15] : memref<1x256xf32, #tpu.memory_space<vmem>>, vector<1x256xf32>
    %20 = vector.broadcast %19 : vector<1x256xf32> to vector<2x256xf32>
    %21 = arith.mulf %18, %20 : vector<2x256xf32>
    %cst_16 = arith.constant dense<0.000000e+00> : vector<2xf32>
    %22 = vector.multi_reduction <add>, %21, %cst_16 [1] : vector<2x256xf32> to vector<2xf32>
    %c0_17 = arith.constant 0 : index
    %23 = memref.load %arg8[%c0_17] : memref<1xf32, #tpu.memory_space<smem>>
    %24 = vector.broadcast %23 : f32 to vector<2xf32>
    %25 = arith.addf %22, %24 : vector<2xf32>
    %26 = vector.shape_cast %25 : vector<2xf32> to vector<1x1x2xf32>
    %c0_18 = arith.constant 0 : index
    %c0_19 = arith.constant 0 : index
    %c0_20 = arith.constant 0 : index
    %27 = vector.load %arg9[%c0_18, %c0_19, %c0_20] : memref<1x1x2xf32, #tpu.memory_space<vmem>>, vector<1x1x2xf32>
    tpu.vector_store %arg9[%c0_18, %c0_19, %c0_20], %26 {strides = array<i32>} : memref<1x1x2xf32, #tpu.memory_space<vmem>>, vector<1x1x2xf32>,
    return
  }
  func.func @transform_0(%arg0: i32) -> (i32, i32) {
    %c0_i32 = arith.constant 0 : i32
    %c0_i32_0 = arith.constant 0 : i32
    return %arg0, %c0_i32 : i32, i32
  }
  func.func @transform_1(%arg0: i32) -> (i32, i32) {
    %c0_i32 = arith.constant 0 : i32
    %c0_i32_0 = arith.constant 0 : i32
    return %arg0, %c0_i32 : i32, i32
  }
  func.func @transform_2(%arg0: i32) -> (i32, i32) {
    %c0_i32 = arith.constant 0 : i32
    %c0_i32_0 = arith.constant 0 : i32
    %c0_i32_1 = arith.constant 0 : i32
    return %c0_i32, %c0_i32_0 : i32, i32
  }
  func.func @transform_3(%arg0: i32) -> (i32, i32) {
    %c0_i32 = arith.constant 0 : i32
    %c0_i32_0 = arith.constant 0 : i32
    %c0_i32_1 = arith.constant 0 : i32
    return %c0_i32, %c0_i32_0 : i32, i32
  }
  func.func @transform_4(%arg0: i32) -> (i32, i32) {
    %c0_i32 = arith.constant 0 : i32
    %c0_i32_0 = arith.constant 0 : i32
    %c0_i32_1 = arith.constant 0 : i32
    return %c0_i32, %c0_i32_0 : i32, i32
  }
  func.func @transform_5(%arg0: i32) -> (i32, i32) {
    %c0_i32 = arith.constant 0 : i32
    %c0_i32_0 = arith.constant 0 : i32
    %c0_i32_1 = arith.constant 0 : i32
    return %c0_i32, %c0_i32_0 : i32, i32
  }
  func.func @transform_6(%arg0: i32) -> (i32, i32) {
    %c0_i32 = arith.constant 0 : i32
    %c0_i32_0 = arith.constant 0 : i32
    %c0_i32_1 = arith.constant 0 : i32
    return %c0_i32, %c0_i32_0 : i32, i32
  }
  func.func @transform_7(%arg0: i32) -> i32 {
    %c0_i32 = arith.constant 0 : i32
    %c0_i32_0 = arith.constant 0 : i32
    return %c0_i32 : i32
  }
  func.func @transform_8(%arg0: i32) -> (i32, i32, i32) {
    %c0_i32 = arith.constant 0 : i32
    %c0_i32_0 = arith.constant 0 : i32
    %c0_i32_1 = arith.constant 0 : i32
    return %arg0, %c0_i32, %c0_i32_0 : i32, i32, i32
  }
}

</mosaic_0001>

<llo_original>
// kernel: critic_forward.1
$region0: #{critic_forward.1}
  #allocation0 [shape = 'u32[]', space=smem, size = 0x4, offset = 0x4, fixed_abs, tag = 'smem constant byte address 0x4 - core index']
  #allocation1 [shape = 'u32[144,128]{1,0:T(1,128)}', space=vmem, size = 0x12000, scoped, tag = 'internal scratch']
  #allocation2 [shape = 'f32[1]{0:T(128)S(6)}', space=smem, size = 0x200, scoped, tag = 'scoped memory for critic_forward.1']
  %s0 = inlined_call_operand.vmem [shape: f32[2,16], index: 0, kind: input, shape index: {}]
  %s1 = inlined_call_operand.vmem [shape: f32[2,8], index: 1, kind: input, shape index: {}]
  %s2 = inlined_call_operand.hbm [shape: bf16[24,256], index: 2, kind: input, shape index: {}]
  %s3 = inlined_call_operand.vmem [shape: f32[1,256], index: 3, kind: input, shape index: {}]
  %s4 = inlined_call_operand.hbm [shape: bf16[256,256], index: 4, kind: input, shape index: {}]
  %s5 = inlined_call_operand.vmem [shape: f32[1,256], index: 5, kind: input, shape index: {}]
  %s6 = inlined_call_operand.vmem [shape: f32[1,256], index: 6, kind: input, shape index: {}]
  %s7 = inlined_call_operand.<no memory space> [shape: f32[1], index: 7, kind: input, shape index: {}]
  %s8 = inlined_call_operand.hbm [shape: f32[1,1,2], index: 8, kind: output, shape index: {}]
  %s9 = sld [smem:[#allocation0]]
  $region50: #{critic_forward.1} parent=0
    _
  %s11 = ssub.s32 1, %s9
  %s12 = scalar_select 0, %s11, %s9
  %13 = sst [smem:[#allocation2]] %s7
  $region1: #{critic_forward.1} parent=0
    #allocation3 [shape = 'u8[12288]{0}', space=vmem, size = 0x3000, scoped, tag = 'input window, operand 2, single buffered']
    #allocation4 [shape = 's32[1]{0}', space=sflag, size = 0x4, scoped, tag = 'scoped memory for critic_forward.1']
    #allocation5 [shape = 's32[1]{0}', space=sflag, size = 0x4, scoped, tag = 'scoped memory for critic_forward.1']
    #allocation6 [shape = 'u8[131072]{0}', space=vmem, size = 0x20000, scoped, tag = 'input window, operand 4, single buffered']
    #allocation7 [shape = 's32[1]{0}', space=sflag, size = 0x4, scoped, tag = 'scoped memory for critic_forward.1']
    #allocation8 [shape = 'u8[512]{0}', space=vmem, size = 0x400, scoped, tag = 'output window, operand 0, single buffered']
    %14 = vsyncpa [#allocation4], 0
    %15 = vsyncpa [#allocation7], 0
    %16 = vsyncpa [#allocation5], 0
    // Predicated region
    $region2: #{critic_forward.1} parent=1 // pred_check
      _
    $region3: #{critic_forward.1} parent=1 // pred_check_branch
      %18 = sbr.rel (0) target = $region5
    $region4: #{critic_forward.1} parent=1 // pred_region
      _
    $region5: #{critic_forward.1} parent=1 // pred_fallthru
      _
    // Predicated region
    $region6: #{critic_forward.1} parent=1 // pred_check
      _
    $region7: #{critic_forward.1} parent=1 // pred_check_branch
      %20 = sbr.rel (0) target = $region9
    $region8: #{critic_forward.1} parent=1 // pred_region
      _
    $region9: #{critic_forward.1} parent=1 // pred_fallthru
      _
    // Predicated region
    $region10: #{critic_forward.1} parent=1 // pred_check
      _
    $region11: #{critic_forward.1} parent=1 // pred_check_branch
      %22 = sbr.rel (0) target = $region13
    $region12: #{critic_forward.1} parent=1 // pred_region
      %s24 = ssub.s32 384, 384
      %25 = vsyncadd [#allocation4], %s24
      %s26 = sshll.u32 [#allocation3], 4
      %s27 = int_to_ptr.vmem [resolvable:$true] %s26
      %32 = dma.hbm_to_vmem [thread:$0]  %s2, 384, %s27, [#allocation4], 128, 128, 8
    $region13: #{critic_forward.1} parent=1 // pred_fallthru
      _
    // Predicated region
    $region14: #{critic_forward.1} parent=1 // pred_check
      _
    $region15: #{critic_forward.1} parent=1 // pred_check_branch
      %34 = sbr.rel (0) target = $region17
    $region16: #{critic_forward.1} parent=1 // pred_region
      _
    $region17: #{critic_forward.1} parent=1 // pred_fallthru
      _
    // Predicated region
    $region18: #{critic_forward.1} parent=1 // pred_check
      _
    $region19: #{critic_forward.1} parent=1 // pred_check_branch
      %36 = sbr.rel (0) target = $region21
    $region20: #{critic_forward.1} parent=1 // pred_region
      %s38 = ssub.s32 4096, 4096
      %39 = vsyncadd [#allocation7], %s38
      %s40 = sshll.u32 [#allocation6], 4
      %s41 = int_to_ptr.vmem [resolvable:$true] %s40
      %46 = dma.hbm_to_vmem [thread:$0]  %s4, 4096, %s41, [#allocation7], 128, 128, 8
    $region21: #{critic_forward.1} parent=1 // pred_fallthru
      _
    // Predicated region
    $region22: #{critic_forward.1} parent=1 // pred_check
      _
    $region23: #{critic_forward.1} parent=1 // pred_check_branch
      %48 = sbr.rel (0) target = $region25
    $region24: #{critic_forward.1} parent=1 // pred_region
      _
    $region25: #{critic_forward.1} parent=1 // pred_fallthru
      _
    // Predicated region
    $region26: #{critic_forward.1} parent=1 // pred_check
      _
    $region27: #{critic_forward.1} parent=1 // pred_check_branch
      %50 = sbr.rel (0) target = $region29
    $region28: #{critic_forward.1} parent=1 // pred_region
      _
    $region29: #{critic_forward.1} parent=1 // pred_fallthru
      _
    // Predicated region
    $region30: #{critic_forward.1} parent=1 // pred_check
      _
    $region31: #{critic_forward.1} parent=1 // pred_check_branch
      %52 = sbr.rel (0) target = $region33
    $region32: #{critic_forward.1} parent=1 // pred_region
      _
    $region33: #{critic_forward.1} parent=1 // pred_fallthru
      _
    // Predicated region
    $region34: #{critic_forward.1} parent=1 // pred_check
      _
    $region35: #{critic_forward.1} parent=1 // pred_check_branch
      %54 = sbr.rel (0) target = $region37
    $region36: #{critic_forward.1} parent=1 // pred_region
      %55 = dma.done [#allocation4], 384
    $region37: #{critic_forward.1} parent=1 // pred_fallthru
      _
    // Predicated region
    $region38: #{critic_forward.1} parent=1 // pred_check
      _
    $region39: #{critic_forward.1} parent=1 // pred_check_branch
      %57 = sbr.rel (0) target = $region41
    $region40: #{critic_forward.1} parent=1 // pred_region
      %58 = dma.done [#allocation7], 4096
    $region41: #{critic_forward.1} parent=1 // pred_fallthru
      _
    %v60 = vld [vmem:[%s0] sm:$0x3]
    %v61 = vld [vmem:[%s1] sm:$0x3]
    %63 = vrot.lane.b32.xlu0 %v61, 16
    %v64 = vpop.permute.xlu0 %63
    %vm66 = vcmask 130048
    %v67 = vsel %vm66, %v60, %v64
    %v68 = vpack.c.bf16 %v67, %v67
    %v69 = vld [vmem:[#allocation3] sm:$0xff]
    %v70 = vld [vmem:[#allocation3 + $0x8] sm:$0xff]
    %v71 = vld [vmem:[#allocation3 + $0x10] sm:$0xff]
    %v72 = vld [vmem:[%s3] sm:$0x3]
    %v74 = vlaneseq
    %v75 = vshrl.u32 %v74, 7
    %v76 = vsub.s32 0, %v75
    %v77 = vrot.slane %v72, %v76
    %v78 = vlaneseq
    %v79 = vshrl.u32 %v78, 7
    %v80 = vsub.s32 1, %v79
    %v81 = vrot.slane %v72, %v80
    %v87 = vunpack.c.l.b16 %v69
    %v88 = vunpack.c.h.b16 %v69
    %v89 = vunpack.c.l.b16 %v70
    %v90 = vunpack.c.h.b16 %v70
    %v91 = vunpack.c.l.b16 %v71
    %v92 = vunpack.c.h.b16 %v71
    %v93 = vpack.c.b16 %v89, %v87
    %v94 = vpack.c.b16 %v90, %v88
    %v95 = vpack.c.b16 %v91, %v91
    %v96 = vpack.c.b16 %v92, %v92
    %vm99 = vcmask 195584
    %v101 = vsel %vm99, %v68, 0
    %vm103 = vcmask 1043456
    %v105 = vsel %vm103, %v95, 0
    %v108 = vsel %vm103, %v96, 0
    %110 = vmatprep.subr.bf16.mxu0 %v94
    %111 = vmatpush1.bf16.msra.mxu0 %v93
    %112 = vmatprep.subr.bf16.mxu0 %v108
    %113 = vmatpush1.bf16.msra.mxu0 %v105
    %114 = vmatprep.subr.bf16.mxu0 0
    %115 = vmatpush1.bf16.msra.mxu0 0
    %116 = vmatprep.subr.bf16.mxu0 0
    %117 = vmatpush1.bf16.msra.mxu0 0
    %118 = vmatprep.subr.bf16.mxu0 0
    %119 = vmatpush1.bf16.msra.mxu0 0
    %120 = vmatprep.subr.bf16.mxu0 0
    %121 = vmatpush1.bf16.msra.mxu0 0
    %122 = vmatprep.subr.bf16.mxu0 0
    %123 = vmatpush1.bf16.msra.mxu0 0
    %124 = vmatprep.subr.bf16.mxu0 0
    %125 = vmatpush1.bf16.msra.mxu0 0
    %126 = vmatprep.subr.bf16.mxu0 0
    %127 = vmatpush1.bf16.msra.mxu0 0
    %128 = vmatprep.subr.bf16.mxu0 0
    %129 = vmatpush1.bf16.msra.mxu0 0
    %130 = vmatprep.subr.bf16.mxu0 0
    %131 = vmatpush1.bf16.msra.mxu0 0
    %132 = vmatprep.subr.bf16.mxu0 0
    %133 = vmatpush1.bf16.msra.mxu0 0
    %134 = vmatprep.subr.bf16.mxu0 0
    %135 = vmatpush1.bf16.msra.mxu0 0
    %136 = vmatprep.subr.bf16.mxu0 0
    %137 = vmatpush1.bf16.msra.mxu0 0
    %138 = vmatprep.subr.bf16.mxu0 0
    %139 = vmatpush1.bf16.msra.mxu0 0
    %140 = vmatprep.subr.bf16.mxu0 0
    %141 = vmatpush1.bf16.msra.mxu0 0
    %142 = vmatprep.mubr.bf16.mxu0 0
    %143 = vmatmul.mubr.bf16.gmra.mrb[0].mxu0 %v101
    %v144 = vpop.f32.mrb[0].mxu0
    %v145 = vadd.f32 %v77, %v144
    %v146 = vpop.f32.mrb[0].mxu0
    %v147 = vadd.f32 %v81, %v146
    %v148 = vpop.f32.mrb[0].mxu0
    %v149 = vpop.f32.mrb[0].mxu0
    %150 = vdwg.mxu0
    %v151 = vmax.f32 %v145, 0.0
    %v152 = vmax.f32 %v147, 0.0
    %v153 = vpack.c.bf16 %v151, %v151
    %v154 = vpack.c.bf16 %v152, %v152
    %v155 = vld [vmem:[#allocation6] sm:$0xff]
    %v156 = vld [vmem:[#allocation6 + $0x8] sm:$0xff]
    %v157 = vld [vmem:[#allocation6 + $0x10] sm:$0xff]
    %v158 = vld [vmem:[#allocation6 + $0x18] sm:$0xff]
    %v159 = vld [vmem:[#allocation6 + $0x20] sm:$0xff]
    %v160 = vld [vmem:[#allocation6 + $0x28] sm:$0xff]
    %v161 = vld [vmem:[#allocation6 + $0x30] sm:$0xff]
    %v162 = vld [vmem:[#allocation6 + $0x38] sm:$0xff]
    %v163 = vld [vmem:[#allocation6 + $0x40] sm:$0xff]
    %v164 = vld [vmem:[#allocation6 + $0x48] sm:$0xff]
    %v165 = vld [vmem:[#allocation6 + $0x50] sm:$0xff]
    %v166 = vld [vmem:[#allocation6 + $0x58] sm:$0xff]
    %v167 = vld [vmem:[#allocation6 + $0x60] sm:$0xff]
    %v168 = vld [vmem:[#allocation6 + $0x68] sm:$0xff]
    %v169 = vld [vmem:[#allocation6 + $0x70] sm:$0xff]
    %v170 = vld [vmem:[#allocation6 + $0x78] sm:$0xff]
    %v171 = vld [vmem:[#allocation6 + $0x80] sm:$0xff]
    %v172 = vld [vmem:[#allocation6 + $0x88] sm:$0xff]
    %v173 = vld [vmem:[#allocation6 + $0x90] sm:$0xff]
    %v174 = vld [vmem:[#allocation6 + $0x98] sm:$0xff]
    %v175 = vld [vmem:[#allocation6 + $0xa0] sm:$0xff]
    %v176 = vld [vmem:[#allocation6 + $0xa8] sm:$0xff]
    %v177 = vld [vmem:[#allocation6 + $0xb0] sm:$0xff]
    %v178 = vld [vmem:[#allocation6 + $0xb8] sm:$0xff]
    %v179 = vld [vmem:[#allocation6 + $0xc0] sm:$0xff]
    %v180 = vld [vmem:[#allocation6 + $0xc8] sm:$0xff]
    %v181 = vld [vmem:[#allocation6 + $0xd0] sm:$0xff]
    %v182 = vld [vmem:[#allocation6 + $0xd8] sm:$0xff]
    %v183 = vld [vmem:[#allocation6 + $0xe0] sm:$0xff]
    %v184 = vld [vmem:[#allocation6 + $0xe8] sm:$0xff]
    %v185 = vld [vmem:[#allocation6 + $0xf0] sm:$0xff]
    %v186 = vld [vmem:[#allocation6 + $0xf8] sm:$0xff]
    %v187 = vld [vmem:[%s5] sm:$0x3]
    %v189 = vlaneseq
    %v190 = vshrl.u32 %v189, 7
    %v191 = vsub.s32 0, %v190
    %v192 = vrot.slane %v187, %v191
    %v193 = vlaneseq
    %v194 = vshrl.u32 %v193, 7
    %v195 = vsub.s32 1, %v194
    %v196 = vrot.slane %v187, %v195
    %v231 = vunpack.c.l.b16 %v155
    %v232 = vunpack.c.h.b16 %v155
    %v233 = vunpack.c.l.b16 %v156
    %v234 = vunpack.c.h.b16 %v156
    %v235 = vunpack.c.l.b16 %v157
    %v236 = vunpack.c.h.b16 %v157
    %v237 = vunpack.c.l.b16 %v158
    %v238 = vunpack.c.h.b16 %v158
    %v239 = vunpack.c.l.b16 %v159
    %v240 = vunpack.c.h.b16 %v159
    %v241 = vunpack.c.l.b16 %v160
    %v242 = vunpack.c.h.b16 %v160
    %v243 = vunpack.c.l.b16 %v161
    %v244 = vunpack.c.h.b16 %v161
    %v245 = vunpack.c.l.b16 %v162
    %v246 = vunpack.c.h.b16 %v162
    %v247 = vunpack.c.l.b16 %v163
    %v248 = vunpack.c.h.b16 %v163
    %v249 = vunpack.c.l.b16 %v164
    %v250 = vunpack.c.h.b16 %v164
    %v251 = vunpack.c.l.b16 %v165
    %v252 = vunpack.c.h.b16 %v165
    %v253 = vunpack.c.l.b16 %v166
    %v254 = vunpack.c.h.b16 %v166
    %v255 = vunpack.c.l.b16 %v167
    %v256 = vunpack.c.h.b16 %v167
    %v257 = vunpack.c.l.b16 %v168
    %v258 = vunpack.c.h.b16 %v168
    %v259 = vunpack.c.l.b16 %v169
    %v260 = vunpack.c.h.b16 %v169
    %v261 = vunpack.c.l.b16 %v170
    %v262 = vunpack.c.h.b16 %v170
    %v263 = vunpack.c.l.b16 %v171
    %v264 = vunpack.c.h.b16 %v171
    %v265 = vunpack.c.l.b16 %v172
    %v266 = vunpack.c.h.b16 %v172
    %v267 = vunpack.c.l.b16 %v173
    %v268 = vunpack.c.h.b16 %v173
    %v269 = vunpack.c.l.b16 %v174
    %v270 = vunpack.c.h.b16 %v174
    %v271 = vunpack.c.l.b16 %v175
    %v272 = vunpack.c.h.b16 %v175
    %v273 = vunpack.c.l.b16 %v176
    %v274 = vunpack.c.h.b16 %v176
    %v275 = vunpack.c.l.b16 %v177
    %v276 = vunpack.c.h.b16 %v177
    %v277 = vunpack.c.l.b16 %v178
    %v278 = vunpack.c.h.b16 %v178
    %v279 = vunpack.c.l.b16 %v179
    %v280 = vunpack.c.h.b16 %v179
    %v281 = vunpack.c.l.b16 %v180
    %v282 = vunpack.c.h.b16 %v180
    %v283 = vunpack.c.l.b16 %v181
    %v284 = vunpack.c.h.b16 %v181
    %v285 = vunpack.c.l.b16 %v182
    %v286 = vunpack.c.h.b16 %v182
    %v287 = vunpack.c.l.b16 %v183
    %v288 = vunpack.c.h.b16 %v183
    %v289 = vunpack.c.l.b16 %v184
    %v290 = vunpack.c.h.b16 %v184
    %v291 = vunpack.c.l.b16 %v185
    %v292 = vunpack.c.h.b16 %v185
    %v293 = vunpack.c.l.b16 %v186
    %v294 = vunpack.c.h.b16 %v186
    %v295 = vpack.c.b16 %v233, %v231
    %v296 = vpack.c.b16 %v234, %v232
    %v297 = vpack.c.b16 %v237, %v235
    %v298 = vpack.c.b16 %v238, %v236
    %v299 = vpack.c.b16 %v241, %v239
    %v300 = vpack.c.b16 %v242, %v240
    %v301 = vpack.c.b16 %v245, %v243
    %v302 = vpack.c.b16 %v246, %v244
    %v303 = vpack.c.b16 %v249, %v247
    %v304 = vpack.c.b16 %v250, %v248
    %v305 = vpack.c.b16 %v253, %v251
    %v306 = vpack.c.b16 %v254, %v252
    %v307 = vpack.c.b16 %v257, %v255
    %v308 = vpack.c.b16 %v258, %v256
    %v309 = vpack.c.b16 %v261, %v259
    %v310 = vpack.c.b16 %v262, %v260
    %v311 = vpack.c.b16 %v265, %v263
    %v312 = vpack.c.b16 %v266, %v264
    %v313 = vpack.c.b16 %v269, %v267
    %v314 = vpack.c.b16 %v270, %v268
    %v315 = vpack.c.b16 %v273, %v271
    %v316 = vpack.c.b16 %v274, %v272
    %v317 = vpack.c.b16 %v277, %v275
    %v318 = vpack.c.b16 %v278, %v276
    %v319 = vpack.c.b16 %v281, %v279
    %v320 = vpack.c.b16 %v282, %v280
    %v321 = vpack.c.b16 %v285, %v283
    %v322 = vpack.c.b16 %v286, %v284
    %v323 = vpack.c.b16 %v289, %v287
    %v324 = vpack.c.b16 %v290, %v288
    %v325 = vpack.c.b16 %v293, %v291
    %v326 = vpack.c.b16 %v294, %v292
    %359 = vmatprep.subr.bf16.mxu0 %v296
    %360 = vmatpush1.bf16.msra.mxu0 %v295
    %361 = vmatprep.subr.bf16.mxu0 %v298
    %362 = vmatpush1.bf16.msra.mxu0 %v297
    %363 = vmatprep.subr.bf16.mxu0 %v300
    %364 = vmatpush1.bf16.msra.mxu0 %v299
    %365 = vmatprep.subr.bf16.mxu0 %v302
    %366 = vmatpush1.bf16.msra.mxu0 %v301
    %367 = vmatprep.subr.bf16.mxu0 %v304
    %368 = vmatpush1.bf16.msra.mxu0 %v303
    %369 = vmatprep.subr.bf16.mxu0 %v306
    %370 = vmatpush1.bf16.msra.mxu0 %v305
    %371 = vmatprep.subr.bf16.mxu0 %v308
    %372 = vmatpush1.bf16.msra.mxu0 %v307
    %373 = vmatprep.subr.bf16.mxu0 %v310
    %374 = vmatpush1.bf16.msra.mxu0 %v309
    %375 = vmatprep.subr.bf16.mxu0 %v312
    %376 = vmatpush1.bf16.msra.mxu0 %v311
    %377 = vmatprep.subr.bf16.mxu0 %v314
    %378 = vmatpush1.bf16.msra.mxu0 %v313
    %379 = vmatprep.subr.bf16.mxu0 %v316
    %380 = vmatpush1.bf16.msra.mxu0 %v315
    %381 = vmatprep.subr.bf16.mxu0 %v318
    %382 = vmatpush1.bf16.msra.mxu0 %v317
    %383 = vmatprep.subr.bf16.mxu0 %v320
    %384 = vmatpush1.bf16.msra.mxu0 %v319
    %385 = vmatprep.subr.bf16.mxu0 %v322
    %386 = vmatpush1.bf16.msra.mxu0 %v321
    %387 = vmatprep.subr.bf16.mxu0 %v324
    %388 = vmatpush1.bf16.msra.mxu0 %v323
    %389 = vmatprep.subr.bf16.mxu0 %v326
    %390 = vmatpush1.bf16.msra.mxu0 %v325
    %391 = vmatprep.mubr.bf16.mxu0 %v154
    %392 = vmatmul.mubr.bf16.gmra.mrb[0].mxu0 %v153
    %v393 = vpop.f32.mrb[0].mxu0
    %v394 = vadd.f32 %v192, %v393
    %v395 = vpop.f32.mrb[0].mxu0
    %v396 = vadd.f32 %v196, %v395
    %v397 = vpop.f32.mrb[0].mxu0
    %v398 = vpop.f32.mrb[0].mxu0
    %399 = vdwg.mxu0
    %v400 = vmax.f32 %v394, 0.0
    %v401 = vmax.f32 %v396, 0.0
    %v402 = vld [vmem:[%s6] sm:$0x3]
    %v404 = vlaneseq
    %v405 = vshrl.u32 %v404, 7
    %v406 = vsub.s32 0, %v405
    %v407 = vrot.slane %v402, %v406
    %v408 = vlaneseq
    %v409 = vshrl.u32 %v408, 7
    %v410 = vsub.s32 1, %v409
    %v411 = vrot.slane %v402, %v410
    %v414 = vmul.f32 %v400, %v407
    %v415 = vmul.f32 %v401, %v411
    %vm416 = vcmask 1041408
    %v417 = vsel %vm416, %v414, 0.0
    %v418 = vsel %vm416, %v415, 0.0
    %v419 = vadd.f32 %v417, %v418
    %420 = vadd.xlane.f32.xlu0 %v419
    %v421 = vpop.xlane.xlu0 %420
    %s422 = sld [smem:[#allocation2]]
    %v423 = vstv %s422
    %v424 = vadd.f32 %v421, %v423
    %v426 = vlaneseq
    %v427 = vand.u32 %v426, 127
    %v428 = vlaneseq
    %v429 = vshrl.u32 %v428, 7
    %v430 = vsub.s32 %v427, %v429
    %v431 = vrot.slane %v424, %v430
    %vm433 = vcmask 8192
    %434 = vst.msk [vmem:[#allocation8] sm:$0x1] %vm433, %v431
    // Predicated region
    $region42: #{critic_forward.1} parent=1 // pred_check
      _
    $region43: #{critic_forward.1} parent=1 // pred_check_branch
      %436 = sbr.rel (0) target = $region45
    $region44: #{critic_forward.1} parent=1 // pred_region
      %s438 = ssub.s32 16, 16
      %439 = vsyncadd [#allocation5], %s438
      %s441 = sshll.u32 [#allocation8], 4
      %s442 = int_to_ptr.vmem [resolvable:$true] %s441
      %444 = dma.vmem_to_hbm [thread:$0]  %s442, 16, %s8, [#allocation5]
    $region45: #{critic_forward.1} parent=1 // pred_fallthru
      _
    // Predicated region
    $region46: #{critic_forward.1} parent=1 // pred_check
      _
    $region47: #{critic_forward.1} parent=1 // pred_check_branch
      %446 = sbr.rel (0) target = $region49
    $region48: #{critic_forward.1} parent=1 // pred_region
      %447 = dma.done [#allocation5], 16
    $region49: #{critic_forward.1} parent=1 // pred_fallthru
      _
    %448 = vsyncpa [#allocation4], 1
    %449 = vsyncpa [#allocation7], 1
    %450 = vsyncpa [#allocation5], 1

</llo_original>
